<compile_context>
chip_gen: v7x
topology: tpu7x:2x2x1
jax: 0.10.0
libtpu: 0.0.40
codegen_flags: <defaults>
</compile_context>

<pallas_src>
import functools
import math

import jax
import jax.numpy as jnp
from jax.experimental import pallas as pl
from jax.experimental.pallas import tpu as pltpu


def _round_up(x, m):
    return (x + m - 1) // m * m


def _vmem_limit_bytes(budget_bytes):
    # 25% headroom + 4 MiB slack; floor at v5e's default scoped limit (16 MiB),
    # cap well below v7x's 64 MiB/TC physical VMEM.
    return int(min(max(budget_bytes * 5 // 4 + (4 << 20), 16 << 20), 48 << 20))


# ------------------------------------------------------------------------------------------
# Path 1: VMEM-resident table + one-hot MXU gather (small vocab).
# ------------------------------------------------------------------------------------------
def _onehot_embed_kernel(ids_ref, table_ref, out_ref, *, scale):
    # ids_ref:   (T, 1) int32 token ids for this tile
    # table_ref: (V_pad, D) full table, VMEM-resident (single-buffered) across grid steps
    # out_ref:   (T, D) output tile
    ids = ids_ref[...]
    t = ids.shape[0]
    v_pad = table_ref.shape[0]
    table = table_ref[...]
    # onehot[t, v] = (ids[t] == v); exact in bf16/f32 since values are 0/1.
    onehot = (jax.lax.broadcasted_iota(jnp.int32, (t, v_pad), 1) == ids).astype(table.dtype)
    gathered = jnp.dot(onehot, table, preferred_element_type=jnp.float32)
    out_ref[...] = (gathered * scale).astype(out_ref.dtype)


def _choose_token_tile(n_tok, token_tile):
    t = max(8, min(token_tile, _round_up(n_tok, 8)))
    if t >= 256:
        t = (t // 256) * 256          # match the 256x256 MXU tile on v6e/v7x
    else:
        t = _round_up(t, 8)           # sublane-dense for tiny problems
    # v7x megacore: keep >= 2 grid steps when there is enough work to split.
    if n_tok >= 512 and _round_up(n_tok, t) // t < 2:
        t = max(256, _round_up((n_tok + 1) // 2, 256))
    return t


def _embedding_onehot(flat_ids, table, scale, out_dtype, token_tile):
    n_tok = flat_ids.shape[0]
    V, D = table.shape

    # Pad vocab to a multiple of 128 so the one-hot lane axis / MXU tiles are dense.
    v_pad = _round_up(V, 128)
    table_p = jnp.pad(table, ((0, v_pad - V), (0, 0))) if v_pad != V else table

    T = _choose_token_tile(n_tok, token_tile)
    n_pad = _round_up(n_tok, T)
    if n_pad != n_tok:
        flat_ids = jnp.pad(flat_ids, (0, n_pad - n_tok))   # pad ids -> gather row 0, sliced off
    ids2d = flat_ids.reshape(n_pad, 1)

    itemsize = table_p.dtype.itemsize
    out_itemsize = jnp.dtype(out_dtype).itemsize
    budget = (
        v_pad * D * itemsize            # resident table (single-buffered)
        + 2 * T * 128 * 4               # ids tile (lane-padded to 128), double-buffered
        + 2 * T * D * out_itemsize      # output tile, double-buffered
        + T * v_pad * 4                 # one-hot operand
        + T * D * 4                     # f32 matmul result
    )

    kernel = functools.partial(_onehot_embed_kernel, scale=scale)
    out = pl.pallas_call(
        kernel,
        out_shape=jax.ShapeDtypeStruct((n_pad, D), out_dtype),
        grid_spec=pl.GridSpec(
            grid=(n_pad // T,),
            in_specs=[
                # (T, 1) tile of token ids per grid step.
                pl.BlockSpec((T, 1), lambda i: (i, 0)),
                # Whole (padded) table; constant index_map -> fetched from HBM exactly once.
                # Single-buffered: a second pipeline buffer would be pure VMEM waste.
                pl.BlockSpec((v_pad, D), lambda i: (0, 0),
                             pipeline_mode=pl.Buffered(buffer_count=1)),
            ],
            out_specs=pl.BlockSpec((T, D), lambda i: (i, 0)),
        ),
        compiler_params=pltpu.CompilerParams(
            dimension_semantics=("parallel",),
            vmem_limit_bytes=_vmem_limit_bytes(budget),
        ),
    )(ids2d, table_p)
    return out[:n_tok]


# ------------------------------------------------------------------------------------------
# Path 2: per-row DMA gather from HBM (large vocab).
# ------------------------------------------------------------------------------------------
def _dma_gather_kernel(ids_smem, table_hbm, out_ref, row_buf, sem,
                       *, scale, tokens, lookahead):
    # ids_smem:  (n_pad,) int32 in SMEM (scalar-prefetched)
    # table_hbm: (V, D) raw HBM ref
    # out_ref:   (tokens, D) output tile
    # row_buf:   (tokens, D) VMEM scratch, sem: (lookahead,) DMA semaphores
    base = pl.program_id(0) * tokens

    def row_copy(t):
        row = ids_smem[base + t]
        return pltpu.make_async_copy(
            table_hbm.at[pl.ds(row, 1), :],
            row_buf.at[pl.ds(t, 1), :],
            sem.at[t % lookahead],
        )

    # Prime a window of in-flight row DMAs.
    @pl.loop(0, lookahead)
    def _(t):
        row_copy(t).start()

    # Wait each row in order; keep the lookahead window full.
    @pl.loop(0, tokens)
    def _(t):
        row_copy(t).wait()

        @pl.when(t + lookahead < tokens)
        def _():
            row_copy(t + lookahead).start()

    out_ref[...] = (row_buf[...].astype(jnp.float32) * scale).astype(out_ref.dtype)


def _embedding_dma_gather(flat_ids, table, scale, out_dtype, gather_token_tile):
    n_tok = flat_ids.shape[0]
    V, D = table.shape

    T = max(8, min(_round_up(gather_token_tile, 8), _round_up(n_tok, 8)))
    n_pad = _round_up(n_tok, T)
    if n_pad != n_tok:
        flat_ids = jnp.pad(flat_ids, (0, n_pad - n_tok))   # pad ids with 0 (valid row)
    lookahead = min(8, T)

    out_itemsize = jnp.dtype(out_dtype).itemsize
    budget = T * D * table.dtype.itemsize + 2 * T * D * out_itemsize + T * D * 4

    kernel = functools.partial(_dma_gather_kernel, scale=scale, tokens=T, lookahead=lookahead)
    out = pl.pallas_call(
        kernel,
        out_shape=jax.ShapeDtypeStruct((n_pad, D), out_dtype),
        grid_spec=pltpu.PrefetchScalarGridSpec(
            num_scalar_prefetch=1,
            grid=(n_pad // T,),
            in_specs=[pl.BlockSpec(memory_space=pl.ANY)],   # table stays in HBM
            out_specs=pl.BlockSpec((T, D), lambda i, ids: (i, 0)),
            scratch_shapes=[
                pltpu.VMEM((T, D), table.dtype),
                pltpu.SemaphoreType.DMA((lookahead,)),
            ],
        ),
        compiler_params=pltpu.CompilerParams(
            dimension_semantics=("parallel",),
            vmem_limit_bytes=_vmem_limit_bytes(budget),
        ),
    )(flat_ids, table)
    return out[:n_tok]


# ------------------------------------------------------------------------------------------
# Public forward (matches Embedding.forward).
# ------------------------------------------------------------------------------------------
def embedding_forward(x, table, apply_weight_embed=True, *, out_dtype=None,
                      token_tile=1024, gather_token_tile=256,
                      resident_vocab_threshold=1024,
                      resident_table_bytes_max=8 * 1024 * 1024):
    """x: [B, S] int ids, table: [V, D]  ->  [B, S, D] (optionally scaled by sqrt(D))."""
    B, S = x.shape
    V, D = table.shape
    scale = float(math.sqrt(D)) if apply_weight_embed else 1.0
    out_dtype = jnp.dtype(out_dtype) if out_dtype is not None else table.dtype
    flat_ids = x.reshape(B * S).astype(jnp.int32)

    table_bytes = _round_up(V, 128) * D * table.dtype.itemsize
    if V <= resident_vocab_threshold and table_bytes <= resident_table_bytes_max:
        out = _embedding_onehot(flat_ids, table, scale, out_dtype, token_tile)
    else:
        out = _embedding_dma_gather(flat_ids, table, scale, out_dtype, gather_token_tile)
    return out.reshape(B, S, D)


if __name__ == "__main__":
    key = jax.random.PRNGKey(0)
    k_w, k_x, k_w2, k_x2 = jax.random.split(key, 4)

    # --- Small vocab: VMEM-resident table + one-hot MXU gather path ---
    VOCAB, D_MODEL, B, S = 64, 128, 2, 8
    APPLY_WEIGHT_EMBED = True
    table = jax.random.normal(k_w, (VOCAB, D_MODEL), dtype=jnp.float32)
    x = jax.random.randint(k_x, (B, S), minval=0, maxval=VOCAB, dtype=jnp.int32)

    out = jax.block_until_ready(embedding_forward(x, table, apply_weight_embed=APPLY_WEIGHT_EMBED))
    ref = table[x] * (math.sqrt(D_MODEL) if APPLY_WEIGHT_EMBED else 1.0)
    assert out.shape == (B, S, D_MODEL), out.shape
    # MXU f32 matmul is internally decomposed into bf16 passes -> small tolerance.
    assert jnp.allclose(out, ref, atol=1e-2, rtol=1e-2), float(jnp.max(jnp.abs(out - ref)))

    # --- Larger vocab: per-row HBM DMA-gather path ---
    VOCAB2, S2 = 2048, 16
    table2 = jax.random.normal(k_w2, (VOCAB2, D_MODEL), dtype=jnp.float32)
    x2 = jax.random.randint(k_x2, (B, S2), minval=0, maxval=VOCAB2, dtype=jnp.int32)

    out2 = jax.block_until_ready(embedding_forward(x2, table2, apply_weight_embed=True))
    ref2 = table2[x2] * math.sqrt(D_MODEL)
    assert out2.shape == (B, S2, D_MODEL), out2.shape
    assert jnp.allclose(out2, ref2, atol=1e-5, rtol=1e-5), float(jnp.max(jnp.abs(out2 - ref2)))

    print("KERNEL_OK")
</pallas_src>

<mosaic_0001>
module attributes {stable_mosaic.version = 11 : i64} {
  func.func @_onehot_embed_kernel(%arg0: i32, %arg1: memref<16x1xi32, #tpu.memory_space<vmem>>, %arg2: memref<128x128xf32, #tpu.memory_space<vmem>>, %arg3: memref<16x128xf32, #tpu.memory_space<vmem>>) attributes {dimension_semantics = [#tpu.dimension_semantics<parallel>], iteration_bounds = array<i64: 1>, scalar_prefetch = 0 : i64, scratch_operands = 0 : i64, tpu.core_type = #tpu.core_type<tc>, window_params = [{transform_indices = @transform_0, window_bounds = array<i64: 16, 1>}, {pipeline_mode = #tpu.pipeline_mode<synchronous>, transform_indices = @transform_1, window_bounds = array<i64: 128, 128>}, {transform_indices = @transform_2, window_bounds = array<i64: 16, 128>}]} {
    %c0 = arith.constant 0 : index
    %c0_0 = arith.constant 0 : index
    %0 = vector.load %arg1[%c0, %c0_0] : memref<16x1xi32, #tpu.memory_space<vmem>>, vector<16x1xi32>
    %c0_1 = arith.constant 0 : index
    %c0_2 = arith.constant 0 : index
    %1 = vector.load %arg2[%c0_1, %c0_2] : memref<128x128xf32, #tpu.memory_space<vmem>>, vector<128x128xf32>
    %2 = tpu.iota {dimensions = array<i32: 1>} : vector<16x128xi32>
    %3 = vector.broadcast %0 : vector<16x1xi32> to vector<16x128xi32>
    %4 = arith.cmpi eq, %2, %3 : vector<16x128xi32>
    %5 = arith.extui %4 : vector<16x128xi1> to vector<16x128xi32>
    %6 = arith.sitofp %5 : vector<16x128xi32> to vector<16x128xf32>
    %cst = arith.constant dense<0.000000e+00> : vector<16x128xf32>
    %7 = tpu.matmul %6, %1, %cst {dimension_numbers = #tpu.dot_dimension_numbers<[1], [0], [0], [1], [0, 0, 1, 1], [], []>} : vector<16x128xf32>, vector<128x128xf32>, vector<16x128xf32> -> vector<16x128xf32>
    %cst_3 = arith.constant 11.3137083 : f32
    %8 = vector.broadcast %cst_3 : f32 to vector<16x128xf32>
    %9 = arith.mulf %7, %8 : vector<16x128xf32>
    %c0_4 = arith.constant 0 : index
    %c0_5 = arith.constant 0 : index
    %10 = vector.load %arg3[%c0_4, %c0_5] : memref<16x128xf32, #tpu.memory_space<vmem>>, vector<16x128xf32>
    tpu.vector_store %arg3[%c0_4, %c0_5], %9 {strides = array<i32>} : memref<16x128xf32, #tpu.memory_space<vmem>>, vector<16x128xf32>,
    return
  }
  func.func @transform_0(%arg0: i32) -> (i32, i32) {
    %c0_i32 = arith.constant 0 : i32
    %c0_i32_0 = arith.constant 0 : i32
    return %arg0, %c0_i32 : i32, i32
  }
  func.func @transform_1(%arg0: i32) -> (i32, i32) {
    %c0_i32 = arith.constant 0 : i32
    %c0_i32_0 = arith.constant 0 : i32
    %c0_i32_1 = arith.constant 0 : i32
    return %c0_i32, %c0_i32_0 : i32, i32
  }
  func.func @transform_2(%arg0: i32) -> (i32, i32) {
    %c0_i32 = arith.constant 0 : i32
    %c0_i32_0 = arith.constant 0 : i32
    return %arg0, %c0_i32 : i32, i32
  }
}

</mosaic_0001>

<llo_original>
// kernel: tpu_custom_call.1
$region0: #{tpu_custom_call.1}
  #allocation0 [shape = 'u32[]', space=smem, size = 0x4, offset = 0x4, fixed_abs, tag = 'smem constant byte address 0x4 - core index']
  #allocation1 [shape = 'u32[144,128]{1,0:T(1,128)}', space=vmem, size = 0x12000, scoped, tag = 'internal scratch']
  %s0 = inlined_call_operand.vmem [shape: s32[16,1], index: 0, kind: input, shape index: {}]
  %s1 = inlined_call_operand.hbm [shape: f32[128,128], index: 1, kind: input, shape index: {}]
  %s2 = inlined_call_operand.hbm [shape: f32[16,128], index: 2, kind: output, shape index: {}]
  %s3 = sld [smem:[#allocation0]]
  $region22: #{tpu_custom_call.1} parent=0
    _
  %s5 = ssub.s32 1, %s3
  %s6 = scalar_select 0, %s5, %s3
  $region1: #{tpu_custom_call.1} parent=0
    #allocation2 [shape = 'u8[65536]{0}', space=vmem, size = 0x10000, scoped, tag = 'input window, operand 1, single buffered']
    #allocation3 [shape = 's32[1]{0}', space=sflag, size = 0x4, scoped, tag = 'scoped memory for tpu_custom_call.1']
    #allocation4 [shape = 's32[1]{0}', space=sflag, size = 0x4, scoped, tag = 'scoped memory for tpu_custom_call.1']
    #allocation5 [shape = 'u8[8192]{0}', space=vmem, size = 0x2000, scoped, tag = 'output window, operand 0, single buffered']
    %7 = vsyncpa [#allocation3], 0
    %8 = vsyncpa [#allocation4], 0
    // Predicated region
    $region2: #{tpu_custom_call.1} parent=1 // pred_check
      _
    $region3: #{tpu_custom_call.1} parent=1 // pred_check_branch
      %10 = sbr.rel (0) target = $region5
    $region4: #{tpu_custom_call.1} parent=1 // pred_region
      _
    $region5: #{tpu_custom_call.1} parent=1 // pred_fallthru
      _
    // Predicated region
    $region6: #{tpu_custom_call.1} parent=1 // pred_check
      _
    $region7: #{tpu_custom_call.1} parent=1 // pred_check_branch
      %12 = sbr.rel (0) target = $region9
    $region8: #{tpu_custom_call.1} parent=1 // pred_region
      %s14 = ssub.s32 2048, 2048
      %15 = vsyncadd [#allocation3], %s14
      %s16 = sshll.u32 [#allocation2], 4
      %s17 = int_to_ptr.vmem [resolvable:$true] %s16
      %22 = dma.hbm_to_vmem [thread:$0]  %s1, 2048, %s17, [#allocation3], 128, 128, 8
    $region9: #{tpu_custom_call.1} parent=1 // pred_fallthru
      _
    // Predicated region
    $region10: #{tpu_custom_call.1} parent=1 // pred_check
      _
    $region11: #{tpu_custom_call.1} parent=1 // pred_check_branch
      %24 = sbr.rel (0) target = $region13
    $region12: #{tpu_custom_call.1} parent=1 // pred_region
      %25 = dma.done [#allocation3], 2048
    $region13: #{tpu_custom_call.1} parent=1 // pred_fallthru
      _
    %v26 = vld [vmem:[%s0] sm:$0xff]
    %v27 = vld [vmem:[%s0 + $0x8] sm:$0xff]
    %v28 = vld [vmem:[#allocation2] sm:$0xff]
    %v29 = vld [vmem:[#allocation2 + $0x8] sm:$0xff]
    %v30 = vld [vmem:[#allocation2 + $0x10] sm:$0xff]
    %v31 = vld [vmem:[#allocation2 + $0x18] sm:$0xff]
    %v32 = vld [vmem:[#allocation2 + $0x20] sm:$0xff]
    %v33 = vld [vmem:[#allocation2 + $0x28] sm:$0xff]
    %v34 = vld [vmem:[#allocation2 + $0x30] sm:$0xff]
    %v35 = vld [vmem:[#allocation2 + $0x38] sm:$0xff]
    %v36 = vld [vmem:[#allocation2 + $0x40] sm:$0xff]
    %v37 = vld [vmem:[#allocation2 + $0x48] sm:$0xff]
    %v38 = vld [vmem:[#allocation2 + $0x50] sm:$0xff]
    %v39 = vld [vmem:[#allocation2 + $0x58] sm:$0xff]
    %v40 = vld [vmem:[#allocation2 + $0x60] sm:$0xff]
    %v41 = vld [vmem:[#allocation2 + $0x68] sm:$0xff]
    %v42 = vld [vmem:[#allocation2 + $0x70] sm:$0xff]
    %v43 = vld [vmem:[#allocation2 + $0x78] sm:$0xff]
    %v44 = vlaneseq
    %v45 = vand.u32 %v44, 127
    %46 = vset.pattern.permute.xlu0 0
    %47 = vperm.xlu0 %46, %v26
    %v48 = vpop.permute.xlu0 %47
    %49 = vset.pattern.permute.xlu0 0
    %50 = vperm.xlu0 %49, %v27
    %v51 = vpop.permute.xlu0 %50
    %vm52 = vcmp.eq.s32.totalorder %v45, %v48
    %vm53 = vcmp.eq.s32.totalorder %v45, %v51
    %v54 = vsel %vm52, 1, 0
    %v55 = vsel %vm53, 1, 0
    %v56 = vcvt.s32.f32 %v54
    %v57 = vcvt.s32.f32 %v55
    %58 = vmatprep.subr.mxu0 0.0
    %59 = vmatpush1.msra.mxu0 %v28
    %60 = vmatprep.subr.mxu0 0.0
    %61 = vmatpush1.msra.mxu0 %v29
    %62 = vmatprep.subr.mxu0 0.0
    %63 = vmatpush1.msra.mxu0 %v30
    %64 = vmatprep.subr.mxu0 0.0
    %65 = vmatpush1.msra.mxu0 %v31
    %66 = vmatprep.subr.mxu0 0.0
    %67 = vmatpush1.msra.mxu0 %v32
    %68 = vmatprep.subr.mxu0 0.0
    %69 = vmatpush1.msra.mxu0 %v33
    %70 = vmatprep.subr.mxu0 0.0
    %71 = vmatpush1.msra.mxu0 %v34
    %72 = vmatprep.subr.mxu0 0.0
    %73 = vmatpush1.msra.mxu0 %v35
    %74 = vmatprep.subr.mxu0 0.0
    %75 = vmatpush1.msra.mxu0 %v36
    %76 = vmatprep.subr.mxu0 0.0
    %77 = vmatpush1.msra.mxu0 %v37
    %78 = vmatprep.subr.mxu0 0.0
    %79 = vmatpush1.msra.mxu0 %v38
    %80 = vmatprep.subr.mxu0 0.0
    %81 = vmatpush1.msra.mxu0 %v39
    %82 = vmatprep.subr.mxu0 0.0
    %83 = vmatpush1.msra.mxu0 %v40
    %84 = vmatprep.subr.mxu0 0.0
    %85 = vmatpush1.msra.mxu0 %v41
    %86 = vmatprep.subr.mxu0 0.0
    %87 = vmatpush1.msra.mxu0 %v42
    %88 = vmatprep.subr.mxu0 0.0
    %89 = vmatpush1.msra.mxu0 %v43
    %90 = vmatprep.subr.mxu0 0.0
    %91 = vmatpush1.msra.mxu0 0.0
    %92 = vmatprep.subr.mxu0 0.0
    %93 = vmatpush1.msra.mxu0 0.0
    %94 = vmatprep.subr.mxu0 0.0
    %95 = vmatpush1.msra.mxu0 0.0
    %96 = vmatprep.subr.mxu0 0.0
    %97 = vmatpush1.msra.mxu0 0.0
    %98 = vmatprep.subr.mxu0 0.0
    %99 = vmatpush1.msra.mxu0 0.0
    %100 = vmatprep.subr.mxu0 0.0
    %101 = vmatpush1.msra.mxu0 0.0
    %102 = vmatprep.subr.mxu0 0.0
    %103 = vmatpush1.msra.mxu0 0.0
    %104 = vmatprep.subr.mxu0 0.0
    %105 = vmatpush1.msra.mxu0 0.0
    %106 = vmatprep.subr.mxu0 0.0
    %107 = vmatpush1.msra.mxu0 0.0
    %108 = vmatprep.subr.mxu0 0.0
    %109 = vmatpush1.msra.mxu0 0.0
    %110 = vmatprep.subr.mxu0 0.0
    %111 = vmatpush1.msra.mxu0 0.0
    %112 = vmatprep.subr.mxu0 0.0
    %113 = vmatpush1.msra.mxu0 0.0
    %114 = vmatprep.subr.mxu0 0.0
    %115 = vmatpush1.msra.mxu0 0.0
    %116 = vmatprep.subr.mxu0 0.0
    %117 = vmatpush1.msra.mxu0 0.0
    %118 = vmatprep.subr.mxu0 0.0
    %119 = vmatpush1.msra.mxu0 0.0
    %120 = vmatprep.subr.mxu0 0.0
    %121 = vmatpush1.msra.mxu0 0.0
    %122 = vmatprep.mubr.f32.mxu0 0.0
    %123 = vmatmul.mubr.f32.gmra.mrb[0].mxu0 %v56
    %v124 = vpop.f32.mrb[0].mxu0
    %v125 = vadd.f32 0.0, %v124
    %v126 = vpop.f32.mrb[0].mxu0
    %127 = vmatprep.mubr.f32.mxu0 0.0
    %128 = vmatmul.mubr.f32.gmra.mrb[0].mxu0 %v57
    %v129 = vpop.f32.mrb[0].mxu0
    %v130 = vadd.f32 0.0, %v129
    %v131 = vpop.f32.mrb[0].mxu0
    %132 = vdwg.mxu0
    %v133 = vmul.f32 %v125, 11.313708
    %v134 = vmul.f32 %v130, 11.313708
    %135 = vst [vmem:[#allocation5] sm:$0xff] %v133
    %136 = vst [vmem:[#allocation5 + $0x8] sm:$0xff] %v134
    // Predicated region
    $region14: #{tpu_custom_call.1} parent=1 // pred_check
      _
    $region15: #{tpu_custom_call.1} parent=1 // pred_check_branch
      %138 = sbr.rel (0) target = $region17
    $region16: #{tpu_custom_call.1} parent=1 // pred_region
      %s140 = ssub.s32 256, 256
      %141 = vsyncadd [#allocation4], %s140
      %s142 = sshll.u32 [#allocation5], 4
      %s143 = int_to_ptr.vmem [resolvable:$true] %s142
      %148 = dma.vmem_to_hbm [thread:$0]  %s143, 256, %s2, [#allocation4], 128, 128, 8
    $region17: #{tpu_custom_call.1} parent=1 // pred_fallthru
      _
    // Predicated region
    $region18: #{tpu_custom_call.1} parent=1 // pred_check
      _
    $region19: #{tpu_custom_call.1} parent=1 // pred_check_branch
      %150 = sbr.rel (0) target = $region21
    $region20: #{tpu_custom_call.1} parent=1 // pred_region
      %151 = dma.done [#allocation4], 256
    $region21: #{tpu_custom_call.1} parent=1 // pred_fallthru
      _
    %152 = vsyncpa [#allocation3], 1
    %153 = vsyncpa [#allocation4], 1

</llo_original>
